<compile_context>
chip_gen: v7x
topology: tpu7x:2x2x1
jax: 0.10.0
libtpu: 0.0.40
codegen_flags: <defaults>
</compile_context>

<pallas_src>
import functools

import jax
import jax.numpy as jnp
from jax.experimental import pallas as pl
from jax.experimental.pallas import tpu as pltpu


# ---------------------------------------------------------------------------
# Kernel 1: streaming global average pool over the spatial axis.
# x2d: (B*C, S) -> pooled mean (B*C, 1) in float32.
# ---------------------------------------------------------------------------
def _pool_kernel(x_ref, o_ref, *, total_s, s_tile, inv_area):
    s_id = pl.program_id(1)
    n_s = pl.num_programs(1)

    # Output block index is constant along the reduction axis, so o_ref stays
    # resident in VMEM and doubles as the f32 accumulator.
    @pl.when(s_id == 0)
    def _():
        o_ref[...] = jnp.zeros_like(o_ref)

    x = x_ref[...].astype(jnp.float32)                    # (row_tile, s_tile)

    if total_s % s_tile != 0:
        # Ragged final tile: mask the padded lanes, but only on the last step
        # so full tiles pay zero extra VPU work.
        is_last = s_id == n_s - 1

        @pl.when(s_id < n_s - 1)
        def _():
            o_ref[...] += jnp.sum(x, axis=-1, keepdims=True)

        @pl.when(is_last)
        def _():
            lane = jax.lax.broadcasted_iota(jnp.int32, x.shape, dimension=1)
            valid = (s_id * s_tile + lane) < total_s
            xm = jnp.where(valid, x, 0.0)
            o_ref[...] += jnp.sum(xm, axis=-1, keepdims=True)
    else:
        o_ref[...] += jnp.sum(x, axis=-1, keepdims=True)

    @pl.when(s_id == n_s - 1)
    def _():
        o_ref[...] *= inv_area


# ---------------------------------------------------------------------------
# Kernel 2: the squeeze MLP on the pooled (B, C) vector.
# Tiny (everything fits VMEM in one shot); runs once, full batch, so the MXU
# sees all B rows at once instead of 8-row slivers.
# ---------------------------------------------------------------------------
def _mlp_kernel(y_ref, w1_ref, b1_ref, w2_ref, b2_ref, o_ref):
    y = y_ref[...].astype(jnp.float32)                    # (B, C)
    h = jnp.dot(y, w1_ref[...].astype(jnp.float32),
                preferred_element_type=jnp.float32)
    h = jnp.maximum(h + b1_ref[...].astype(jnp.float32), 0.0)   # (B, 2C)
    out = jnp.dot(h, w2_ref[...].astype(jnp.float32),
                  preferred_element_type=jnp.float32)
    o_ref[...] = (out + b2_ref[...].astype(jnp.float32)).astype(o_ref.dtype)
    # TODO(synk): for very large C (weights > ~32 MiB) this one-shot MLP call
    # should itself be tiled over the hidden dimension.


# ---------------------------------------------------------------------------
# Tile / VMEM heuristics.
# ---------------------------------------------------------------------------
def _vmem_capacity_bytes(default=64 << 20):
    """Physical VMEM of the local TPU; falls back to the v7x minimum."""
    try:
        info = pltpu.get_tpu_info()
        cap = getattr(info, "vmem_capacity_bytes", None)
        if cap:
            return int(cap)
    except Exception:
        pass
    return default


def _choose_s_tile(n_rows, S, itemsize, tile_budget):
    """Spatial tile: full row when it fits (longest contiguous DMA run, no
    ragged tail); otherwise the largest lane-dense (multiple-of-128) chunk
    that keeps an 8-row slab within the tile budget."""
    min_rows = min(n_rows, 8)
    if S <= 128 or S * min_rows * itemsize <= tile_budget:
        return int(S)
    st = (tile_budget // (min_rows * itemsize)) // 128 * 128
    return int(max(128, min(st, (S // 128) * 128)))


def _choose_row_tile(n_rows, s_tile, itemsize, tile_budget):
    """Row tile: sublane-dense (multiple of 8) and filling the byte budget,
    while keeping >= 2 row blocks when possible (v7x megacore)."""
    if n_rows <= 8:
        return int(n_rows)                      # full-dim block is always legal
    max_rows = max(8, tile_budget // max(1, s_tile * itemsize))
    rt = int(min((n_rows // 8) * 8, (max_rows // 8) * 8))
    rt = max(8, rt)
    if rt >= n_rows and n_rows >= 16:
        rt = max(8, ((n_rows // 2) // 8) * 8)   # give both TensorCores work
    return rt


# ---------------------------------------------------------------------------
# Wrapper: pooled mean (Pallas) -> squeeze MLP (Pallas).
# ---------------------------------------------------------------------------
def cwa_layer(x, w1, b1, w2, b2, *, s_tile=None, row_tile=None):
    """x: (B, C, H, W).  w1: (C, 2C), b1: (2C,), w2: (2C, C), b2: (C,).
    Returns (B, C) — equivalent to CWALayer.forward."""
    B, C, H, W = x.shape
    S = H * W
    R = B * C
    x2d = x.reshape(R, S)                        # free for contiguous NCHW
    itemsize = x.dtype.itemsize

    vmem_cap = _vmem_capacity_bytes()
    # x is the only pipelined operand and is double-buffered, so the per-tile
    # budget is ~(60% of VMEM)/2, capped at 16 MiB (8-16 MiB tiles on every
    # generation: big enough to amortize the ~0.35 us/step overhead, small
    # enough for the v7x 64 MiB core).
    tile_budget = int(max(1 << 20, min(16 << 20, (vmem_cap * 6 // 10) // 2)))

    if s_tile is None:
        s_tile = _choose_s_tile(R, S, itemsize, tile_budget)
    assert s_tile == S or s_tile % 128 == 0, "spatial tile must be lane-dense"
    if row_tile is None:
        row_tile = _choose_row_tile(R, s_tile, itemsize, tile_budget)

    grid = (pl.cdiv(R, row_tile), pl.cdiv(S, s_tile))

    # Explicit VMEM budget: double-buffered x tile + resident f32 output block.
    x_tile_bytes = row_tile * s_tile * itemsize
    out_tile_bytes = row_tile * 4
    needed = 2 * x_tile_bytes + 2 * out_tile_bytes + (2 << 20)
    vmem_limit = int(min(max(needed, 16 << 20), max(vmem_cap * 3 // 4, needed)))
    vmem_limit = int(min(vmem_limit, 128 << 20))

    pool_kernel = functools.partial(
        _pool_kernel, total_s=S, s_tile=s_tile, inv_area=1.0 / float(S))

    pooled = pl.pallas_call(
        pool_kernel,
        out_shape=jax.ShapeDtypeStruct((R, 1), jnp.float32),
        grid=grid,
        in_specs=[pl.BlockSpec((row_tile, s_tile), lambda r, s: (r, s))],
        out_specs=pl.BlockSpec((row_tile, 1), lambda r, s: (r, 0)),
        compiler_params=pltpu.CompilerParams(
            dimension_semantics=("parallel", "arbitrary"),
            vmem_limit_bytes=vmem_limit,
        ),
        cost_estimate=pl.CostEstimate(
            flops=int(R * S),
            transcendentals=0,
            bytes_accessed=int(R * S * itemsize + R * 4),
        ),
    )(x2d)

    # Squeeze MLP on the tiny pooled tensor (full batch, one shot).
    y = pooled.reshape(B, C)
    b1_2d = b1.reshape(1, -1)
    b2_2d = b2.reshape(1, -1)

    param_bytes = ((w1.size + w2.size) * w1.dtype.itemsize
                   + (b1.size + b2.size) * b1.dtype.itemsize)
    act_bytes = B * C * 4 + B * 2 * C * 4 + B * C * x.dtype.itemsize
    mlp_needed = 2 * (param_bytes + act_bytes) + (2 << 20)
    mlp_vmem = int(min(max(mlp_needed, 16 << 20), 128 << 20))

    out = pl.pallas_call(
        _mlp_kernel,
        out_shape=jax.ShapeDtypeStruct((B, C), x.dtype),
        compiler_params=pltpu.CompilerParams(vmem_limit_bytes=mlp_vmem),
        cost_estimate=pl.CostEstimate(
            flops=int(8 * B * C * C),
            transcendentals=0,
            bytes_accessed=int(param_bytes + act_bytes),
        ),
    )(y, w1, b1_2d, w2, b2_2d)
    return out


def cwa_reference(x, w1, b1, w2, b2):
    """Pure-JAX reference of the PyTorch forward."""
    y = jnp.mean(x, axis=(2, 3))                 # AdaptiveAvgPool2d(1) + view
    h = jnp.maximum(y @ w1 + b1, 0.0)            # Linear + ReLU
    return h @ w2 + b2                           # Linear


if __name__ == "__main__":
    key = jax.random.PRNGKey(0)
    kx, kx2, kw1, kb1, kw2, kb2 = jax.random.split(key, 6)

    B, C, H, W = 2, 4, 16, 16
    x = jax.random.normal(kx, (B, C, H, W), dtype=jnp.float32)

    # Deterministic synthetic parameters (nn.Linear(C, 2C) / nn.Linear(2C, C),
    # stored transposed as (in, out)).
    w1 = jax.random.normal(kw1, (C, 2 * C), dtype=jnp.float32) * 0.1
    b1 = jax.random.normal(kb1, (2 * C,), dtype=jnp.float32) * 0.1
    w2 = jax.random.normal(kw2, (2 * C, C), dtype=jnp.float32) * 0.1
    b2 = jax.random.normal(kb2, (C,), dtype=jnp.float32) * 0.1

    ref = cwa_reference(x, w1, b1, w2, b2)

    # Default tiling (single spatial tile at this small size).
    out = jax.block_until_ready(cwa_layer(x, w1, b1, w2, b2))
    assert out.shape == (B, C), out.shape
    assert jnp.allclose(out, ref, atol=1e-5, rtol=1e-5), "mismatch (default)"

    # Force a multi-step spatial reduction (accumulator path, no ragged tail).
    out_tiled = jax.block_until_ready(cwa_layer(x, w1, b1, w2, b2, s_tile=128))
    assert jnp.allclose(out_tiled, ref, atol=1e-5, rtol=1e-5), "mismatch (tiled)"

    # Ragged spatial tail: S = 20*20 = 400 = 3*128 + 16 exercises the masked
    # last-step path.
    x_rag = jax.random.normal(kx2, (B, C, 20, 20), dtype=jnp.float32)
    ref_rag = cwa_reference(x_rag, w1, b1, w2, b2)
    out_rag = jax.block_until_ready(
        cwa_layer(x_rag, w1, b1, w2, b2, s_tile=128))
    assert jnp.allclose(out_rag, ref_rag, atol=1e-5, rtol=1e-5), "mismatch (ragged)"

    print("KERNEL_OK")
</pallas_src>

<mosaic_0001>
module attributes {stable_mosaic.version = 11 : i64} {
  func.func @_pool_kernel(%arg0: i32, %arg1: i32, %arg2: memref<8x256xf32, #tpu.memory_space<vmem>>, %arg3: memref<8x1xf32, #tpu.memory_space<vmem>>) attributes {dimension_semantics = [#tpu.dimension_semantics<parallel>, #tpu.dimension_semantics<arbitrary>], iteration_bounds = array<i64: 1, 1>, scalar_prefetch = 0 : i64, scratch_operands = 0 : i64, tpu.core_type = #tpu.core_type<tc>, window_params = [{transform_indices = @transform_0, window_bounds = array<i64: 8, 256>}, {transform_indices = @transform_1, window_bounds = array<i64: 8, 1>}]} {
    %c0_i32 = arith.constant 0 : i32
    %0 = arith.cmpi eq, %arg1, %c0_i32 : i32
    %1 = arith.extui %0 : i1 to i32
    %c0_i32_0 = arith.constant 0 : i32
    %2 = arith.cmpi ne, %1, %c0_i32_0 : i32
    scf.if %2 {
      %cst_8 = arith.constant 0.000000e+00 : f32
      %12 = vector.broadcast %cst_8 : f32 to vector<8x1xf32>
      %c0_9 = arith.constant 0 : index
      %c0_10 = arith.constant 0 : index
      %13 = vector.load %arg3[%c0_9, %c0_10] : memref<8x1xf32, #tpu.memory_space<vmem>>, vector<8x1xf32>
      tpu.vector_store %arg3[%c0_9, %c0_10], %12 {strides = array<i32>} : memref<8x1xf32, #tpu.memory_space<vmem>>, vector<8x1xf32>,
    } else {
    }
    %c0 = arith.constant 0 : index
    %c0_1 = arith.constant 0 : index
    %3 = vector.load %arg2[%c0, %c0_1] : memref<8x256xf32, #tpu.memory_space<vmem>>, vector<8x256xf32>
    %c0_2 = arith.constant 0 : index
    %c0_3 = arith.constant 0 : index
    %4 = vector.load %arg3[%c0_2, %c0_3] : memref<8x1xf32, #tpu.memory_space<vmem>>, vector<8x1xf32>
    %cst = arith.constant dense<0.000000e+00> : vector<8xf32>
    %5 = vector.multi_reduction <add>, %3, %cst [1] : vector<8x256xf32> to vector<8xf32>
    %6 = vector.shape_cast %5 : vector<8xf32> to vector<8x1xf32>
    %7 = arith.addf %4, %6 : vector<8x1xf32>
    %c0_4 = arith.constant 0 : index
    %c0_5 = arith.constant 0 : index
    %8 = vector.load %arg3[%c0_4, %c0_5] : memref<8x1xf32, #tpu.memory_space<vmem>>, vector<8x1xf32>
    tpu.vector_store %arg3[%c0_4, %c0_5], %7 {strides = array<i32>} : memref<8x1xf32, #tpu.memory_space<vmem>>, vector<8x1xf32>,
    %c0_i32_6 = arith.constant 0 : i32
    %9 = arith.cmpi eq, %arg1, %c0_i32_6 : i32
    %10 = arith.extui %9 : i1 to i32
    %c0_i32_7 = arith.constant 0 : i32
    %11 = arith.cmpi ne, %10, %c0_i32_7 : i32
    scf.if %11 {
      %c0_8 = arith.constant 0 : index
      %c0_9 = arith.constant 0 : index
      %12 = vector.load %arg3[%c0_8, %c0_9] : memref<8x1xf32, #tpu.memory_space<vmem>>, vector<8x1xf32>
      %cst_10 = arith.constant 3.906250e-03 : f32
      %13 = vector.broadcast %cst_10 : f32 to vector<8x1xf32>
      %14 = arith.mulf %12, %13 : vector<8x1xf32>
      %c0_11 = arith.constant 0 : index
      %c0_12 = arith.constant 0 : index
      %15 = vector.load %arg3[%c0_11, %c0_12] : memref<8x1xf32, #tpu.memory_space<vmem>>, vector<8x1xf32>
      tpu.vector_store %arg3[%c0_11, %c0_12], %14 {strides = array<i32>} : memref<8x1xf32, #tpu.memory_space<vmem>>, vector<8x1xf32>,
    } else {
    }
    return
  }
  func.func @transform_0(%arg0: i32, %arg1: i32) -> (i32, i32) {
    %c0_i32 = arith.constant 0 : i32
    return %arg0, %arg1 : i32, i32
  }
  func.func @transform_1(%arg0: i32, %arg1: i32) -> (i32, i32) {
    %c0_i32 = arith.constant 0 : i32
    %c0_i32_0 = arith.constant 0 : i32
    return %arg0, %c0_i32 : i32, i32
  }
}

</mosaic_0001>

<llo_original>
// kernel: tpu_custom_call.1
$region0: #{tpu_custom_call.1}
  #allocation0 [shape = 'u32[]', space=smem, size = 0x4, offset = 0x4, fixed_abs, tag = 'smem constant byte address 0x4 - core index']
  #allocation1 [shape = 'u32[144,128]{1,0:T(1,128)}', space=vmem, size = 0x12000, scoped, tag = 'internal scratch']
  %s0 = inlined_call_operand.hbm [shape: f32[8,256], index: 0, kind: input, shape index: {}]
  %s1 = inlined_call_operand.vmem [shape: f32[8,1], index: 1, kind: output, shape index: {}]
  %s2 = sld [smem:[#allocation0]]
  $region26: #{tpu_custom_call.1} parent=0
    _
  %s4 = ssub.s32 1, %s2
  %s5 = scalar_select 0, %s4, %s2
  $region1: #{tpu_custom_call.1} parent=0
    #allocation2 [shape = 'u8[8192]{0}', space=vmem, size = 0x2000, scoped, tag = 'input window, operand 0, single buffered']
    #allocation3 [shape = 's32[1]{0}', space=sflag, size = 0x4, scoped, tag = 'scoped memory for tpu_custom_call.1']
    %6 = vsyncpa [#allocation3], 0
    // Predicated region
    $region2: #{tpu_custom_call.1} parent=1 // pred_check
      _
    $region3: #{tpu_custom_call.1} parent=1 // pred_check_branch
      %8 = sbr.rel (0) target = $region5
    $region4: #{tpu_custom_call.1} parent=1 // pred_region
      %s10 = ssub.s32 256, 256
      %11 = vsyncadd [#allocation3], %s10
      %s13 = sshll.u32 [#allocation2], 4
      %s14 = int_to_ptr.vmem [resolvable:$true] %s13
      %16 = dma.hbm_to_vmem [thread:$0]  %s0, 256, %s14, [#allocation3]
    $region5: #{tpu_custom_call.1} parent=1 // pred_fallthru
      _
    // Predicated region
    $region6: #{tpu_custom_call.1} parent=1 // pred_check
      _
    $region7: #{tpu_custom_call.1} parent=1 // pred_check_branch
      %18 = sbr.rel (0) target = $region9
    $region8: #{tpu_custom_call.1} parent=1 // pred_region
      %19 = dma.done [#allocation3], 256
    $region9: #{tpu_custom_call.1} parent=1 // pred_fallthru
      _
    %p20 = scmp.eq.s32.totalorder 0, 0
    // Predicated region
    $region10: #{tpu_custom_call.1} parent=1 // pred_check
      %p21 = pneg %p20
    $region11: #{tpu_custom_call.1} parent=1 // pred_check_branch
      %23 = sbr.rel (%p21) target = $region13
    $region12: #{tpu_custom_call.1} parent=1 // pred_region
      %vm24 = vcmask 7168
      %25 = vst.msk [vmem:[%s1] sm:$0xff] %vm24, 0.0
    $region13: #{tpu_custom_call.1} parent=1 // pred_fallthru
      _
    %v26 = vld [vmem:[#allocation2] sm:$0xff]
    %v27 = vld [vmem:[#allocation2 + $0x8] sm:$0xff]
    %v28 = vld [vmem:[%s1] sm:$0xff]
    %v29 = vadd.f32 %v26, %v27
    %30 = vadd.xlane.f32.xlu0 %v29
    %v31 = vpop.xlane.xlu0 %30
    %v32 = vadd.f32 %v28, %v31
    %vm33 = vcmask 7168
    %34 = vst.msk [vmem:[%s1] sm:$0xff] %vm33, %v32
    // Predicated region
    $region14: #{tpu_custom_call.1} parent=1 // pred_check
      %p35 = pneg %p20
    $region15: #{tpu_custom_call.1} parent=1 // pred_check_branch
      %37 = sbr.rel (%p35) target = $region17
    $region16: #{tpu_custom_call.1} parent=1 // pred_region
      %v38 = vld [vmem:[%s1] sm:$0xff]
      %v39 = vmul.f32 %v38, 0.00390625
      %40 = vst.msk [vmem:[%s1] sm:$0xff] %vm33, %v39
    $region17: #{tpu_custom_call.1} parent=1 // pred_fallthru
      _
    // Predicated region
    $region18: #{tpu_custom_call.1} parent=1 // pred_check
      _
    $region19: #{tpu_custom_call.1} parent=1 // pred_check_branch
      %42 = sbr.rel (0) target = $region21
    $region20: #{tpu_custom_call.1} parent=1 // pred_region
      _
    $region21: #{tpu_custom_call.1} parent=1 // pred_fallthru
      _
    // Predicated region
    $region22: #{tpu_custom_call.1} parent=1 // pred_check
      _
    $region23: #{tpu_custom_call.1} parent=1 // pred_check_branch
      %44 = sbr.rel (0) target = $region25
    $region24: #{tpu_custom_call.1} parent=1 // pred_region
      _
    $region25: #{tpu_custom_call.1} parent=1 // pred_fallthru
      _
    %45 = vsyncpa [#allocation3], 1

</llo_original>
